<compile_context>
chip_gen: v7x
topology: tpu7x:2x2x1
jax: 0.10.0
libtpu: 0.0.40
codegen_flags: <defaults>
</compile_context>

<pallas_src>
import math
from functools import partial

import jax
import jax.numpy as jnp
from jax import lax
from jax.experimental import pallas as pl
from jax.experimental.pallas import tpu as pltpu


# ----------------------------------------------------------------------------
# Variant A: fully VMEM-resident, in-kernel unrolled layer loop (small stacks)
# ----------------------------------------------------------------------------
def _vgcn_resident_kernel(a_ref, x_ref, w_in_ref, b_in_ref, w_stack_ref,
                          w_out_ref, b_out_ref, o_ref, *, alpha, num_layers):
    # inLayer: h0 = relu(x @ W_in + b_in)
    init = jnp.dot(x_ref[...], w_in_ref[...],
                   preferred_element_type=jnp.float32)
    init = jnp.maximum(init + b_in_ref[...], 0.0)
    alpha_h0 = jnp.float32(alpha) * init          # pre-scaled once, reused per layer
    a = a_ref[...]                                # bf16 adjacency, resident

    def layer_body(l, h_bf16):
        # VGCNLayer: h = relu((A_hat @ h + alpha * h0) @ W_l)
        agg = jnp.dot(a, h_bf16, preferred_element_type=jnp.float32)
        z = (agg + alpha_h0).astype(jnp.bfloat16)
        h_new = jnp.maximum(
            jnp.dot(z, w_stack_ref[l], preferred_element_type=jnp.float32), 0.0)
        return h_new.astype(jnp.bfloat16)

    h = lax.fori_loop(0, num_layers, layer_body, init.astype(jnp.bfloat16),
                      unroll=True)

    # outLayer: y = h @ W_out + b_out
    out = jnp.dot(h, w_out_ref[...],
                  preferred_element_type=jnp.float32) + b_out_ref[...]
    o_ref[...] = out.astype(o_ref.dtype)


# ----------------------------------------------------------------------------
# Variant B: grid=(num_layers,) streams per-layer weights (large stacks)
# ----------------------------------------------------------------------------
def _vgcn_streamed_kernel(a_ref, x_ref, w_in_ref, b_in_ref, w_l_ref, w_out_ref,
                          b_out_ref, o_ref, h_scr, init_scr, *, alpha,
                          num_layers):
    layer = pl.program_id(0)

    # ---- inLayer (first grid step only): h0 = relu(x @ W_in + b_in) --------
    @pl.when(layer == 0)
    def _():
        init = jnp.dot(x_ref[...], w_in_ref[...],
                       preferred_element_type=jnp.float32)
        init = jnp.maximum(init + b_in_ref[...], 0.0)
        init_scr[...] = jnp.float32(alpha) * init      # store alpha*h0 (f32)
        h_scr[...] = init.astype(jnp.bfloat16)         # carried h in bf16

    # ---- VGCNLayer: h = relu((A_hat @ h + alpha * h0) @ W_l) ---------------
    agg = jnp.dot(a_ref[...], h_scr[...], preferred_element_type=jnp.float32)
    z = (agg + init_scr[...]).astype(jnp.bfloat16)
    h_new = jnp.maximum(
        jnp.dot(z, w_l_ref[...], preferred_element_type=jnp.float32), 0.0)
    h_scr[...] = h_new.astype(jnp.bfloat16)

    # ---- outLayer (last grid step only): y = h @ W_out + b_out -------------
    @pl.when(layer == num_layers - 1)
    def _():
        out = jnp.dot(h_new.astype(jnp.bfloat16), w_out_ref[...],
                      preferred_element_type=jnp.float32) + b_out_ref[...]
        o_ref[...] = out.astype(o_ref.dtype)


# ----------------------------------------------------------------------------
# Wrapper: padding, weight stacking, path selection, pallas_call
# ----------------------------------------------------------------------------
def _round_up(x, m):
    return ((x + m - 1) // m) * m


def _pad2d(x, rows, cols):
    return jnp.pad(x, ((0, rows - x.shape[0]), (0, cols - x.shape[1])))


def _vmem_limit_bytes():
    # Generation-aware limit: ~7/8 of physical VMEM
    # (~112 MiB on v5e/v6e's 128 MiB, ~56 MiB on v7x's 64 MiB).
    try:
        cap = int(pltpu.get_tpu_info().vmem_capacity_bytes)
    except Exception:
        cap = 64 * 1024 * 1024
    return max(32 * 1024 * 1024, cap - cap // 8)


def vgcn_layer_net(params, a_hat, features, alpha=1.0, force_stream=False):
    """Forward pass of VGCNLayerNet (dense symmetric-normalized adjacency)."""
    # TODO(synk): training-mode dropout (p>0) would need pltpu.prng_*; the
    # module default (dropout=0) makes it an identity here.
    n, f = features.shape
    h_dim = params["w_in"].shape[1]
    c = params["w_out"].shape[1]
    num_layers = len(params["w_layers"])
    assert num_layers >= 1

    # Sublane padding of N to 16 (bf16 sublane pack); lane padding to 128 for
    # unmasked, lane-dense loads/stores and full MXU N-dims.
    n_pad = _round_up(n, 16)
    f_pad = _round_up(f, 128)
    h_pad = _round_up(h_dim, 128)
    c_pad = _round_up(c, 128)

    a_p = _pad2d(a_hat, n_pad, n_pad).astype(jnp.bfloat16)
    x_p = _pad2d(features, n_pad, f_pad).astype(jnp.bfloat16)
    w_in_p = _pad2d(params["w_in"], f_pad, h_pad).astype(jnp.bfloat16)
    b_in_p = jnp.pad(params["b_in"], (0, h_pad - h_dim)).reshape(1, h_pad).astype(jnp.float32)
    w_stack_p = jnp.stack(
        [_pad2d(w, h_pad, h_pad) for w in params["w_layers"]]).astype(jnp.bfloat16)
    w_out_p = _pad2d(params["w_out"], h_pad, c_pad).astype(jnp.bfloat16)
    b_out_p = jnp.pad(params["b_out"], (0, c_pad - c)).reshape(1, c_pad).astype(jnp.float32)

    flops = int(2 * n_pad * f_pad * h_pad
                + num_layers * (2 * n_pad * n_pad * h_pad + 2 * n_pad * h_pad * h_pad)
                + 2 * n_pad * h_pad * c_pad)
    bytes_accessed = int(2 * (n_pad * n_pad + n_pad * f_pad + f_pad * h_pad
                              + num_layers * h_pad * h_pad + h_pad * c_pad)
                         + 4 * (h_pad + c_pad + n_pad * c_pad))
    cost = pl.CostEstimate(flops=flops, transcendentals=0,
                           bytes_accessed=bytes_accessed)

    vmem_limit = _vmem_limit_bytes()
    # Rough VMEM footprint of the fully-resident variant: 2x inputs (default
    # double buffering) + f32/bf16 activation temporaries.
    input_bytes = (2 * n_pad * n_pad + 2 * n_pad * f_pad + 2 * f_pad * h_pad
                   + 4 * h_pad + 2 * num_layers * h_pad * h_pad
                   + 2 * h_pad * c_pad + 4 * c_pad + 4 * n_pad * c_pad)
    act_bytes = 24 * n_pad * h_pad
    resident_ok = (2 * input_bytes + act_bytes) < (3 * vmem_limit) // 4

    compiler_params = pltpu.CompilerParams(
        dimension_semantics=("arbitrary",),        # layers are sequential
        vmem_limit_bytes=vmem_limit,
    )

    # TODO(synk): for very large N, row/col-tile the A_hat @ h contraction
    # (grid over node tiles + f32 accumulator) and single-buffer the
    # grid-invariant inputs; this is needed earlier on v7x (N~2-2.5k, 64 MiB
    # VMEM) than on v5e/v6e (N~3.5-4k, 128 MiB). At the sizes handled here the
    # whole padded problem is VMEM-resident, which is optimal.
    if resident_ok and not force_stream:
        out = pl.pallas_call(
            partial(_vgcn_resident_kernel, alpha=float(alpha),
                    num_layers=num_layers),
            out_shape=jax.ShapeDtypeStruct((n_pad, c_pad), jnp.float32),
            grid_spec=pltpu.PrefetchScalarGridSpec(
                num_scalar_prefetch=0,
                grid=(1,),
                in_specs=[
                    pl.BlockSpec((n_pad, n_pad), lambda i: (0, 0)),            # A_hat
                    pl.BlockSpec((n_pad, f_pad), lambda i: (0, 0)),            # features
                    pl.BlockSpec((f_pad, h_pad), lambda i: (0, 0)),            # W_in
                    pl.BlockSpec((1, h_pad), lambda i: (0, 0)),                # b_in
                    pl.BlockSpec((num_layers, h_pad, h_pad),
                                 lambda i: (0, 0, 0)),                         # W stack
                    pl.BlockSpec((h_pad, c_pad), lambda i: (0, 0)),            # W_out
                    pl.BlockSpec((1, c_pad), lambda i: (0, 0)),                # b_out
                ],
                out_specs=pl.BlockSpec((n_pad, c_pad), lambda i: (0, 0)),
            ),
            compiler_params=compiler_params,
            cost_estimate=cost,
        )(a_p, x_p, w_in_p, b_in_p, w_stack_p, w_out_p, b_out_p)
    else:
        out = pl.pallas_call(
            partial(_vgcn_streamed_kernel, alpha=float(alpha),
                    num_layers=num_layers),
            out_shape=jax.ShapeDtypeStruct((n_pad, c_pad), jnp.float32),
            grid_spec=pltpu.PrefetchScalarGridSpec(
                num_scalar_prefetch=0,
                grid=(num_layers,),
                in_specs=[
                    pl.BlockSpec((n_pad, n_pad), lambda l: (0, 0)),            # A_hat
                    pl.BlockSpec((n_pad, f_pad), lambda l: (0, 0)),            # features
                    pl.BlockSpec((f_pad, h_pad), lambda l: (0, 0)),            # W_in
                    pl.BlockSpec((1, h_pad), lambda l: (0, 0)),                # b_in
                    # per-layer weight streamed by the grid; leading dim
                    # squeezed so the kernel sees a 2-D (H,H) ref directly.
                    pl.BlockSpec((None, h_pad, h_pad), lambda l: (l, 0, 0)),   # W_l
                    pl.BlockSpec((h_pad, c_pad), lambda l: (0, 0)),            # W_out
                    pl.BlockSpec((1, c_pad), lambda l: (0, 0)),                # b_out
                ],
                out_specs=pl.BlockSpec((n_pad, c_pad), lambda l: (0, 0)),
                scratch_shapes=[
                    pltpu.VMEM((n_pad, h_pad), jnp.bfloat16),   # h  (bf16 carry)
                    pltpu.VMEM((n_pad, h_pad), jnp.float32),    # alpha * h0
                ],
            ),
            compiler_params=compiler_params,
            cost_estimate=cost,
        )(a_p, x_p, w_in_p, b_in_p, w_stack_p, w_out_p, b_out_p)

    return out[:n, :c]


# ----------------------------------------------------------------------------
# Pure-JAX reference (same bf16 operand casting, f32 accumulation)
# ----------------------------------------------------------------------------
def reference_forward(params, a_hat, features, alpha=1.0):
    a = a_hat.astype(jnp.bfloat16)
    x = features.astype(jnp.bfloat16)
    init = jnp.dot(x, params["w_in"].astype(jnp.bfloat16),
                   preferred_element_type=jnp.float32) + params["b_in"]
    init = jnp.maximum(init, 0.0)
    h = init
    for w in params["w_layers"]:
        agg = jnp.dot(a, h.astype(jnp.bfloat16), preferred_element_type=jnp.float32)
        z = agg + jnp.float32(alpha) * init
        h = jnp.maximum(
            jnp.dot(z.astype(jnp.bfloat16), w.astype(jnp.bfloat16),
                    preferred_element_type=jnp.float32), 0.0)
    out = jnp.dot(h.astype(jnp.bfloat16), params["w_out"].astype(jnp.bfloat16),
                  preferred_element_type=jnp.float32) + params["b_out"]
    return out


# ----------------------------------------------------------------------------
# Parameter / graph construction
# ----------------------------------------------------------------------------
def init_params(key, num_feats, num_classes, num_hidden, num_layers):
    ks = jax.random.split(key, 4 + num_layers)

    def lin(k, fin, fout):
        bound = 1.0 / math.sqrt(fin)
        return jax.random.uniform(k, (fin, fout), jnp.float32, -bound, bound)

    def bias(k, fin, fout):
        bound = 1.0 / math.sqrt(fin)
        return jax.random.uniform(k, (fout,), jnp.float32, -bound, bound)

    p = {}
    p["w_in"] = lin(ks[0], num_feats, num_hidden)
    p["b_in"] = bias(ks[1], num_feats, num_hidden)
    p["w_layers"] = [lin(ks[2 + i], num_hidden, num_hidden) for i in range(num_layers)]
    p["w_out"] = lin(ks[2 + num_layers], num_hidden, num_classes)
    p["b_out"] = bias(ks[3 + num_layers], num_hidden, num_classes)
    return p


def build_graph(n):
    # ring graph + self loops, symmetric normalization: D^{-1/2}(A+I)D^{-1/2}
    adj = jnp.zeros((n, n), jnp.float32)
    idx = jnp.arange(n)
    adj = adj.at[idx, (idx + 1) % n].set(1.0)
    adj = adj.at[(idx + 1) % n, idx].set(1.0)
    adj = adj + jnp.eye(n, dtype=jnp.float32)
    deg = adj.sum(axis=1)
    d_inv_sqrt = 1.0 / jnp.sqrt(deg)
    return adj * d_inv_sqrt[:, None] * d_inv_sqrt[None, :]


def _run_case(key, n, f, h, c, layers, alpha, force_stream):
    k_feat, k_param = jax.random.split(key)
    features = jax.random.normal(k_feat, (n, f), jnp.float32)
    a_hat = build_graph(n)
    params = init_params(k_param, f, c, h, layers)

    out = vgcn_layer_net(params, a_hat, features, alpha=alpha,
                         force_stream=force_stream)
    out = jax.block_until_ready(out)
    assert out.shape == (n, c), out.shape
    assert bool(jnp.all(jnp.isfinite(out)))

    ref = reference_forward(params, a_hat, features, alpha=alpha)
    max_err = float(jnp.max(jnp.abs(out - ref)))
    assert max_err < 5e-2, f"max abs error vs reference: {max_err}"


if __name__ == "__main__":
    key = jax.random.PRNGKey(0)
    k1, k2, k3 = jax.random.split(key, 3)

    # Default small config -> fully VMEM-resident path (in-kernel layer loop).
    _run_case(k1, n=16, f=8, h=32, c=4, layers=2, alpha=1.0, force_stream=False)

    # Streamed-weight path (grid over layers), slightly larger config.
    _run_case(k2, n=32, f=12, h=48, c=5, layers=3, alpha=0.5, force_stream=True)

    # num_layers == 1 edge case on the streamed path (both pl.when branches
    # fire in the same grid step).
    _run_case(k3, n=16, f=8, h=32, c=4, layers=1, alpha=1.0, force_stream=True)

    print("KERNEL_OK")
</pallas_src>

<mosaic_0001>
module attributes {stable_mosaic.version = 11 : i64} {
  func.func @_vgcn_resident_kernel(%arg0: i32, %arg1: memref<16x16xbf16, #tpu.memory_space<vmem>>, %arg2: memref<16x128xbf16, #tpu.memory_space<vmem>>, %arg3: memref<128x128xbf16, #tpu.memory_space<vmem>>, %arg4: memref<1x128xf32, #tpu.memory_space<vmem>>, %arg5: memref<2x128x128xbf16, #tpu.memory_space<vmem>>, %arg6: memref<128x128xbf16, #tpu.memory_space<vmem>>, %arg7: memref<1x128xf32, #tpu.memory_space<vmem>>, %arg8: memref<16x128xf32, #tpu.memory_space<vmem>>) attributes {dimension_semantics = [#tpu.dimension_semantics<arbitrary>], iteration_bounds = array<i64: 1>, scalar_prefetch = 0 : i64, scratch_operands = 0 : i64, tpu.core_type = #tpu.core_type<tc>, window_params = [{pipeline_mode = #tpu.pipeline_mode<synchronous>, transform_indices = @transform_0, window_bounds = array<i64: 16, 16>}, {pipeline_mode = #tpu.pipeline_mode<synchronous>, transform_indices = @transform_1, window_bounds = array<i64: 16, 128>}, {pipeline_mode = #tpu.pipeline_mode<synchronous>, transform_indices = @transform_2, window_bounds = array<i64: 128, 128>}, {pipeline_mode = #tpu.pipeline_mode<synchronous>, transform_indices = @transform_3, window_bounds = array<i64: 1, 128>}, {pipeline_mode = #tpu.pipeline_mode<synchronous>, transform_indices = @transform_4, window_bounds = array<i64: 2, 128, 128>}, {pipeline_mode = #tpu.pipeline_mode<synchronous>, transform_indices = @transform_5, window_bounds = array<i64: 128, 128>}, {pipeline_mode = #tpu.pipeline_mode<synchronous>, transform_indices = @transform_6, window_bounds = array<i64: 1, 128>}, {pipeline_mode = #tpu.pipeline_mode<synchronous>, transform_indices = @transform_7, window_bounds = array<i64: 16, 128>}]} {
    %c0 = arith.constant 0 : index
    %c0_0 = arith.constant 0 : index
    %0 = vector.load %arg2[%c0, %c0_0] : memref<16x128xbf16, #tpu.memory_space<vmem>>, vector<16x128xbf16>
    %c0_1 = arith.constant 0 : index
    %c0_2 = arith.constant 0 : index
    %1 = vector.load %arg3[%c0_1, %c0_2] : memref<128x128xbf16, #tpu.memory_space<vmem>>, vector<128x128xbf16>
    %cst = arith.constant dense<0.000000e+00> : vector<16x128xf32>
    %2 = tpu.matmul %0, %1, %cst {dimension_numbers = #tpu.dot_dimension_numbers<[1], [0], [0], [1], [0, 0, 1, 1], [], []>} : vector<16x128xbf16>, vector<128x128xbf16>, vector<16x128xf32> -> vector<16x128xf32>
    %c0_3 = arith.constant 0 : index
    %c0_4 = arith.constant 0 : index
    %3 = vector.load %arg4[%c0_3, %c0_4] : memref<1x128xf32, #tpu.memory_space<vmem>>, vector<1x128xf32>
    %4 = vector.broadcast %3 : vector<1x128xf32> to vector<16x128xf32>
    %5 = arith.addf %2, %4 : vector<16x128xf32>
    %cst_5 = arith.constant 0.000000e+00 : f32
    %6 = vector.broadcast %cst_5 : f32 to vector<16x128xf32>
    %7 = arith.maximumf %5, %6 : vector<16x128xf32>
    %cst_6 = arith.constant 1.000000e+00 : f32
    %8 = vector.broadcast %cst_6 : f32 to vector<16x128xf32>
    %9 = arith.mulf %8, %7 : vector<16x128xf32>
    %c0_7 = arith.constant 0 : index
    %c0_8 = arith.constant 0 : index
    %10 = vector.load %arg1[%c0_7, %c0_8] : memref<16x16xbf16, #tpu.memory_space<vmem>>, vector<16x16xbf16>
    %11 = arith.truncf %7 : vector<16x128xf32> to vector<16x128xbf16>
    %c0_i32 = arith.constant 0 : i32
    %cst_9 = arith.constant dense<0.000000e+00> : vector<16x128xf32>
    %12 = tpu.matmul %10, %11, %cst_9 {dimension_numbers = #tpu.dot_dimension_numbers<[1], [0], [0], [1], [0, 0, 1, 1], [], []>} : vector<16x16xbf16>, vector<16x128xbf16>, vector<16x128xf32> -> vector<16x128xf32>
    %13 = arith.addf %12, %9 : vector<16x128xf32>
    %14 = arith.truncf %13 : vector<16x128xf32> to vector<16x128xbf16>
    %15 = arith.index_cast %c0_i32 : i32 to index
    %c0_10 = arith.constant 0 : index
    %c0_11 = arith.constant 0 : index
    %16 = vector.load %arg5[%15, %c0_10, %c0_11] : memref<2x128x128xbf16, #tpu.memory_space<vmem>>, vector<1x128x128xbf16>
    %17 = vector.shape_cast %16 : vector<1x128x128xbf16> to vector<128x128xbf16>
    %cst_12 = arith.constant dense<0.000000e+00> : vector<16x128xf32>
    %18 = tpu.matmul %14, %17, %cst_12 {dimension_numbers = #tpu.dot_dimension_numbers<[1], [0], [0], [1], [0, 0, 1, 1], [], []>} : vector<16x128xbf16>, vector<128x128xbf16>, vector<16x128xf32> -> vector<16x128xf32>
    %cst_13 = arith.constant 0.000000e+00 : f32
    %19 = vector.broadcast %cst_13 : f32 to vector<16x128xf32>
    %20 = arith.maximumf %18, %19 : vector<16x128xf32>
    %21 = arith.truncf %20 : vector<16x128xf32> to vector<16x128xbf16>
    %c1_i32 = arith.constant 1 : i32
    %cst_14 = arith.constant dense<0.000000e+00> : vector<16x128xf32>
    %22 = tpu.matmul %10, %21, %cst_14 {dimension_numbers = #tpu.dot_dimension_numbers<[1], [0], [0], [1], [0, 0, 1, 1], [], []>} : vector<16x16xbf16>, vector<16x128xbf16>, vector<16x128xf32> -> vector<16x128xf32>
    %23 = arith.addf %22, %9 : vector<16x128xf32>
    %24 = arith.truncf %23 : vector<16x128xf32> to vector<16x128xbf16>
    %25 = arith.index_cast %c1_i32 : i32 to index
    %c0_15 = arith.constant 0 : index
    %c0_16 = arith.constant 0 : index
    %26 = vector.load %arg5[%25, %c0_15, %c0_16] : memref<2x128x128xbf16, #tpu.memory_space<vmem>>, vector<1x128x128xbf16>
    %27 = vector.shape_cast %26 : vector<1x128x128xbf16> to vector<128x128xbf16>
    %cst_17 = arith.constant dense<0.000000e+00> : vector<16x128xf32>
    %28 = tpu.matmul %24, %27, %cst_17 {dimension_numbers = #tpu.dot_dimension_numbers<[1], [0], [0], [1], [0, 0, 1, 1], [], []>} : vector<16x128xbf16>, vector<128x128xbf16>, vector<16x128xf32> -> vector<16x128xf32>
    %cst_18 = arith.constant 0.000000e+00 : f32
    %29 = vector.broadcast %cst_18 : f32 to vector<16x128xf32>
    %30 = arith.maximumf %28, %29 : vector<16x128xf32>
    %31 = arith.truncf %30 : vector<16x128xf32> to vector<16x128xbf16>
    %c2_i32 = arith.constant 2 : i32
    %c0_19 = arith.constant 0 : index
    %c0_20 = arith.constant 0 : index
    %32 = vector.load %arg6[%c0_19, %c0_20] : memref<128x128xbf16, #tpu.memory_space<vmem>>, vector<128x128xbf16>
    %cst_21 = arith.constant dense<0.000000e+00> : vector<16x128xf32>
    %33 = tpu.matmul %31, %32, %cst_21 {dimension_numbers = #tpu.dot_dimension_numbers<[1], [0], [0], [1], [0, 0, 1, 1], [], []>} : vector<16x128xbf16>, vector<128x128xbf16>, vector<16x128xf32> -> vector<16x128xf32>
    %c0_22 = arith.constant 0 : index
    %c0_23 = arith.constant 0 : index
    %34 = vector.load %arg7[%c0_22, %c0_23] : memref<1x128xf32, #tpu.memory_space<vmem>>, vector<1x128xf32>
    %35 = vector.broadcast %34 : vector<1x128xf32> to vector<16x128xf32>
    %36 = arith.addf %33, %35 : vector<16x128xf32>
    %c0_24 = arith.constant 0 : index
    %c0_25 = arith.constant 0 : index
    %37 = vector.load %arg8[%c0_24, %c0_25] : memref<16x128xf32, #tpu.memory_space<vmem>>, vector<16x128xf32>
    tpu.vector_store %arg8[%c0_24, %c0_25], %36 {strides = array<i32>} : memref<16x128xf32, #tpu.memory_space<vmem>>, vector<16x128xf32>,
    return
  }
  func.func @transform_0(%arg0: i32) -> (i32, i32) {
    %c0_i32 = arith.constant 0 : i32
    %c0_i32_0 = arith.constant 0 : i32
    %c0_i32_1 = arith.constant 0 : i32
    return %c0_i32, %c0_i32_0 : i32, i32
  }
  func.func @transform_1(%arg0: i32) -> (i32, i32) {
    %c0_i32 = arith.constant 0 : i32
    %c0_i32_0 = arith.constant 0 : i32
    %c0_i32_1 = arith.constant 0 : i32
    return %c0_i32, %c0_i32_0 : i32, i32
  }
  func.func @transform_2(%arg0: i32) -> (i32, i32) {
    %c0_i32 = arith.constant 0 : i32
    %c0_i32_0 = arith.constant 0 : i32
    %c0_i32_1 = arith.constant 0 : i32
    return %c0_i32, %c0_i32_0 : i32, i32
  }
  func.func @transform_3(%arg0: i32) -> (i32, i32) {
    %c0_i32 = arith.constant 0 : i32
    %c0_i32_0 = arith.constant 0 : i32
    %c0_i32_1 = arith.constant 0 : i32
    return %c0_i32, %c0_i32_0 : i32, i32
  }
  func.func @transform_4(%arg0: i32) -> (i32, i32, i32) {
    %c0_i32 = arith.constant 0 : i32
    %c0_i32_0 = arith.constant 0 : i32
    %c0_i32_1 = arith.constant 0 : i32
    %c0_i32_2 = arith.constant 0 : i32
    return %c0_i32, %c0_i32_0, %c0_i32_1 : i32, i32, i32
  }
  func.func @transform_5(%arg0: i32) -> (i32, i32) {
    %c0_i32 = arith.constant 0 : i32
    %c0_i32_0 = arith.constant 0 : i32
    %c0_i32_1 = arith.constant 0 : i32
    return %c0_i32, %c0_i32_0 : i32, i32
  }
  func.func @transform_6(%arg0: i32) -> (i32, i32) {
    %c0_i32 = arith.constant 0 : i32
    %c0_i32_0 = arith.constant 0 : i32
    %c0_i32_1 = arith.constant 0 : i32
    return %c0_i32, %c0_i32_0 : i32, i32
  }
  func.func @transform_7(%arg0: i32) -> (i32, i32) {
    %c0_i32 = arith.constant 0 : i32
    %c0_i32_0 = arith.constant 0 : i32
    %c0_i32_1 = arith.constant 0 : i32
    return %c0_i32, %c0_i32_0 : i32, i32
  }
}

</mosaic_0001>

<llo_original>
// kernel: tpu_custom_call.1
$region0: #{tpu_custom_call.1}
  #allocation0 [shape = 'u32[]', space=smem, size = 0x4, offset = 0x4, fixed_abs, tag = 'smem constant byte address 0x4 - core index']
  #allocation1 [shape = 'u32[144,128]{1,0:T(1,128)}', space=vmem, size = 0x12000, scoped, tag = 'internal scratch']
  %s0 = inlined_call_operand.hbm [shape: bf16[16,16], index: 0, kind: input, shape index: {}]
  %s1 = inlined_call_operand.hbm [shape: bf16[16,128], index: 1, kind: input, shape index: {}]
  %s2 = inlined_call_operand.hbm [shape: bf16[128,128], index: 2, kind: input, shape index: {}]
  %s3 = inlined_call_operand.vmem [shape: f32[1,128], index: 3, kind: input, shape index: {}]
  %s4 = inlined_call_operand.hbm [shape: bf16[2,128,128], index: 4, kind: input, shape index: {}]
  %s5 = inlined_call_operand.hbm [shape: bf16[128,128], index: 5, kind: input, shape index: {}]
  %s6 = inlined_call_operand.vmem [shape: f32[1,128], index: 6, kind: input, shape index: {}]
  %s7 = inlined_call_operand.hbm [shape: f32[16,128], index: 7, kind: output, shape index: {}]
  %s8 = sld [smem:[#allocation0]]
  $region58: #{tpu_custom_call.1} parent=0
    _
  %s10 = ssub.s32 1, %s8
  %s11 = scalar_select 0, %s10, %s8
  $region1: #{tpu_custom_call.1} parent=0
    #allocation2 [shape = 'u8[4096]{0}', space=vmem, size = 0x1000, scoped, tag = 'input window, operand 0, single buffered']
    #allocation3 [shape = 's32[1]{0}', space=sflag, size = 0x4, scoped, tag = 'scoped memory for tpu_custom_call.1']
    #allocation4 [shape = 's32[1]{0}', space=sflag, size = 0x4, scoped, tag = 'scoped memory for tpu_custom_call.1']
    #allocation5 [shape = 'u8[4096]{0}', space=vmem, size = 0x1000, scoped, tag = 'input window, operand 1, single buffered']
    #allocation6 [shape = 's32[1]{0}', space=sflag, size = 0x4, scoped, tag = 'scoped memory for tpu_custom_call.1']
    #allocation7 [shape = 'u8[32768]{0}', space=vmem, size = 0x8000, scoped, tag = 'input window, operand 2, single buffered']
    #allocation8 [shape = 'u8[65536]{0}', space=vmem, size = 0x10000, scoped, tag = 'input window, operand 4, single buffered']
    #allocation9 [shape = 's32[1]{0}', space=sflag, size = 0x4, scoped, tag = 'scoped memory for tpu_custom_call.1']
    #allocation10 [shape = 'u8[32768]{0}', space=vmem, size = 0x8000, scoped, tag = 'input window, operand 5, single buffered']
    #allocation11 [shape = 'u8[8192]{0}', space=vmem, size = 0x2000, scoped, tag = 'output window, operand 0, single buffered']
    %12 = vsyncpa [#allocation3], 0
    %13 = vsyncpa [#allocation6], 0
    %14 = vsyncpa [#allocation9], 0
    %15 = vsyncpa [#allocation4], 0
    // Predicated region
    $region2: #{tpu_custom_call.1} parent=1 // pred_check
      _
    $region3: #{tpu_custom_call.1} parent=1 // pred_check_branch
      %17 = sbr.rel (0) target = $region5
    $region4: #{tpu_custom_call.1} parent=1 // pred_region
      %s19 = ssub.s32 128, 128
      %20 = vsyncadd [#allocation3], %s19
      %s21 = sshll.u32 [#allocation2], 4
      %s22 = int_to_ptr.vmem [resolvable:$true] %s21
      %27 = dma.hbm_to_vmem [thread:$0]  %s0, 128, %s22, [#allocation3], 64, 64, 4
    $region5: #{tpu_custom_call.1} parent=1 // pred_fallthru
      _
    // Predicated region
    $region6: #{tpu_custom_call.1} parent=1 // pred_check
      _
    $region7: #{tpu_custom_call.1} parent=1 // pred_check_branch
      %29 = sbr.rel (0) target = $region9
    $region8: #{tpu_custom_call.1} parent=1 // pred_region
      %s31 = ssub.s32 128, 128
      %32 = vsyncadd [#allocation6], %s31
      %s33 = sshll.u32 [#allocation5], 4
      %s34 = int_to_ptr.vmem [resolvable:$true] %s33
      %39 = dma.hbm_to_vmem [thread:$0]  %s1, 128, %s34, [#allocation6], 64, 64, 4
    $region9: #{tpu_custom_call.1} parent=1 // pred_fallthru
      _
    // Predicated region
    $region10: #{tpu_custom_call.1} parent=1 // pred_check
      _
    $region11: #{tpu_custom_call.1} parent=1 // pred_check_branch
      %41 = sbr.rel (0) target = $region13
    $region12: #{tpu_custom_call.1} parent=1 // pred_region
      %s43 = ssub.s32 1024, 1024
      %44 = vsyncadd [#allocation6], %s43
      %s45 = sshll.u32 [#allocation7], 4
      %s46 = int_to_ptr.vmem [resolvable:$true] %s45
      %51 = dma.hbm_to_vmem [thread:$0]  %s2, 1024, %s46, [#allocation6], 64, 64, 4
    $region13: #{tpu_custom_call.1} parent=1 // pred_fallthru
      _
    // Predicated region
    $region14: #{tpu_custom_call.1} parent=1 // pred_check
      _
    $region15: #{tpu_custom_call.1} parent=1 // pred_check_branch
      %53 = sbr.rel (0) target = $region17
    $region16: #{tpu_custom_call.1} parent=1 // pred_region
      _
    $region17: #{tpu_custom_call.1} parent=1 // pred_fallthru
      _
    // Predicated region
    $region18: #{tpu_custom_call.1} parent=1 // pred_check
      _
    $region19: #{tpu_custom_call.1} parent=1 // pred_check_branch
      %55 = sbr.rel (0) target = $region21
    $region20: #{tpu_custom_call.1} parent=1 // pred_region
      %s57 = ssub.s32 2048, 2048
      %58 = vsyncadd [#allocation9], %s57
      %s59 = sshll.u32 [#allocation8], 4
      %s60 = int_to_ptr.vmem [resolvable:$true] %s59
      %65 = dma.hbm_to_vmem [thread:$0]  %s4, 2048, %s60, [#allocation9], 64, 64, 4
    $region21: #{tpu_custom_call.1} parent=1 // pred_fallthru
      _
    // Predicated region
    $region22: #{tpu_custom_call.1} parent=1 // pred_check
      _
    $region23: #{tpu_custom_call.1} parent=1 // pred_check_branch
      %67 = sbr.rel (0) target = $region25
    $region24: #{tpu_custom_call.1} parent=1 // pred_region
      %s69 = ssub.s32 1024, 1024
      %70 = vsyncadd [#allocation9], %s69
      %s71 = sshll.u32 [#allocation10], 4
      %s72 = int_to_ptr.vmem [resolvable:$true] %s71
      %77 = dma.hbm_to_vmem [thread:$0]  %s5, 1024, %s72, [#allocation9], 64, 64, 4
    $region25: #{tpu_custom_call.1} parent=1 // pred_fallthru
      _
    // Predicated region
    $region26: #{tpu_custom_call.1} parent=1 // pred_check
      _
    $region27: #{tpu_custom_call.1} parent=1 // pred_check_branch
      %79 = sbr.rel (0) target = $region29
    $region28: #{tpu_custom_call.1} parent=1 // pred_region
      _
    $region29: #{tpu_custom_call.1} parent=1 // pred_fallthru
      _
    // Predicated region
    $region30: #{tpu_custom_call.1} parent=1 // pred_check
      _
    $region31: #{tpu_custom_call.1} parent=1 // pred_check_branch
      %81 = sbr.rel (0) target = $region33
    $region32: #{tpu_custom_call.1} parent=1 // pred_region
      %82 = dma.done [#allocation3], 128
    $region33: #{tpu_custom_call.1} parent=1 // pred_fallthru
      _
    // Predicated region
    $region34: #{tpu_custom_call.1} parent=1 // pred_check
      _
    $region35: #{tpu_custom_call.1} parent=1 // pred_check_branch
      %84 = sbr.rel (0) target = $region37
    $region36: #{tpu_custom_call.1} parent=1 // pred_region
      %85 = dma.done [#allocation6], 128
    $region37: #{tpu_custom_call.1} parent=1 // pred_fallthru
      _
    // Predicated region
    $region38: #{tpu_custom_call.1} parent=1 // pred_check
      _
    $region39: #{tpu_custom_call.1} parent=1 // pred_check_branch
      %87 = sbr.rel (0) target = $region41
    $region40: #{tpu_custom_call.1} parent=1 // pred_region
      %88 = dma.done [#allocation6], 1024
    $region41: #{tpu_custom_call.1} parent=1 // pred_fallthru
      _
    // Predicated region
    $region42: #{tpu_custom_call.1} parent=1 // pred_check
      _
    $region43: #{tpu_custom_call.1} parent=1 // pred_check_branch
      %90 = sbr.rel (0) target = $region45
    $region44: #{tpu_custom_call.1} parent=1 // pred_region
      %91 = dma.done [#allocation9], 2048
    $region45: #{tpu_custom_call.1} parent=1 // pred_fallthru
      _
    // Predicated region
    $region46: #{tpu_custom_call.1} parent=1 // pred_check
      _
    $region47: #{tpu_custom_call.1} parent=1 // pred_check_branch
      %93 = sbr.rel (0) target = $region49
    $region48: #{tpu_custom_call.1} parent=1 // pred_region
      %94 = dma.done [#allocation9], 1024
    $region49: #{tpu_custom_call.1} parent=1 // pred_fallthru
      _
    %v96 = vld [vmem:[#allocation5] sm:$0xf]
    %v97 = vld [vmem:[#allocation5 + $0x4] sm:$0xf]
    %v98 = vld [vmem:[#allocation7] sm:$0xf]
    %v99 = vld [vmem:[#allocation7 + $0x4] sm:$0xf]
    %v100 = vld [vmem:[#allocation7 + $0x8] sm:$0xf]
    %v101 = vld [vmem:[#allocation7 + $0xc] sm:$0xf]
    %v102 = vld [vmem:[#allocation7 + $0x10] sm:$0xf]
    %v103 = vld [vmem:[#allocation7 + $0x14] sm:$0xf]
    %v104 = vld [vmem:[#allocation7 + $0x18] sm:$0xf]
    %v105 = vld [vmem:[#allocation7 + $0x1c] sm:$0xf]
    %v106 = vld [vmem:[#allocation7 + $0x20] sm:$0xf]
    %v107 = vld [vmem:[#allocation7 + $0x24] sm:$0xf]
    %v108 = vld [vmem:[#allocation7 + $0x28] sm:$0xf]
    %v109 = vld [vmem:[#allocation7 + $0x2c] sm:$0xf]
    %v110 = vld [vmem:[#allocation7 + $0x30] sm:$0xf]
    %v111 = vld [vmem:[#allocation7 + $0x34] sm:$0xf]
    %v112 = vld [vmem:[#allocation7 + $0x38] sm:$0xf]
    %v113 = vld [vmem:[#allocation7 + $0x3c] sm:$0xf]
    %v114 = vld [vmem:[%s3] sm:$0x1]
    %v116 = vlaneseq
    %v117 = vshrl.u32 %v116, 7
    %v118 = vsub.s32 0, %v117
    %v119 = vrot.slane %v114, %v118
    %v123 = vunpack.c.l.b16 %v96
    %v124 = vunpack.c.l.b16 %v97
    %v125 = vpack.c.b16 %v124, %v123
    %v143 = vunpack.c.l.b16 %v98
    %v144 = vunpack.c.l.b16 %v99
    %v145 = vunpack.c.l.b16 %v100
    %v146 = vunpack.c.l.b16 %v101
    %v147 = vunpack.c.l.b16 %v102
    %v148 = vunpack.c.l.b16 %v103
    %v149 = vunpack.c.l.b16 %v104
    %v150 = vunpack.c.l.b16 %v105
    %v151 = vunpack.c.l.b16 %v106
    %v152 = vunpack.c.l.b16 %v107
    %v153 = vunpack.c.l.b16 %v108
    %v154 = vunpack.c.l.b16 %v109
    %v155 = vunpack.c.l.b16 %v110
    %v156 = vunpack.c.l.b16 %v111
    %v157 = vunpack.c.l.b16 %v112
    %v158 = vunpack.c.l.b16 %v113
    %v159 = vpack.c.b16 %v144, %v143
    %v160 = vpack.c.b16 %v146, %v145
    %v161 = vpack.c.b16 %v148, %v147
    %v162 = vpack.c.b16 %v150, %v149
    %v163 = vpack.c.b16 %v152, %v151
    %v164 = vpack.c.b16 %v154, %v153
    %v165 = vpack.c.b16 %v156, %v155
    %v166 = vpack.c.b16 %v158, %v157
    %175 = vmatprep.subr.bf16.mxu0 0
    %176 = vmatpush1.bf16.msra.mxu0 %v159
    %177 = vmatprep.subr.bf16.mxu0 0
    %178 = vmatpush1.bf16.msra.mxu0 %v160
    %179 = vmatprep.subr.bf16.mxu0 0
    %180 = vmatpush1.bf16.msra.mxu0 %v161
    %181 = vmatprep.subr.bf16.mxu0 0
    %182 = vmatpush1.bf16.msra.mxu0 %v162
    %183 = vmatprep.subr.bf16.mxu0 0
    %184 = vmatpush1.bf16.msra.mxu0 %v163
    %185 = vmatprep.subr.bf16.mxu0 0
    %186 = vmatpush1.bf16.msra.mxu0 %v164
    %187 = vmatprep.subr.bf16.mxu0 0
    %188 = vmatpush1.bf16.msra.mxu0 %v165
    %189 = vmatprep.subr.bf16.mxu0 0
    %190 = vmatpush1.bf16.msra.mxu0 %v166
    %191 = vmatprep.subr.bf16.mxu0 0
    %192 = vmatpush1.bf16.msra.mxu0 0
    %193 = vmatprep.subr.bf16.mxu0 0
    %194 = vmatpush1.bf16.msra.mxu0 0
    %195 = vmatprep.subr.bf16.mxu0 0
    %196 = vmatpush1.bf16.msra.mxu0 0
    %197 = vmatprep.subr.bf16.mxu0 0
    %198 = vmatpush1.bf16.msra.mxu0 0
    %199 = vmatprep.subr.bf16.mxu0 0
    %200 = vmatpush1.bf16.msra.mxu0 0
    %201 = vmatprep.subr.bf16.mxu0 0
    %202 = vmatpush1.bf16.msra.mxu0 0
    %203 = vmatprep.subr.bf16.mxu0 0
    %204 = vmatpush1.bf16.msra.mxu0 0
    %205 = vmatprep.subr.bf16.mxu0 0
    %206 = vmatpush1.bf16.msra.mxu0 0
    %207 = vmatprep.mubr.bf16.mxu0 0
    %208 = vmatmul.mubr.bf16.gmra.mrb[0].mxu0 %v125
    %v209 = vpop.f32.mrb[0].mxu0
    %v210 = vadd.f32 %v119, %v209
    %v211 = vpop.f32.mrb[0].mxu0
    %v212 = vpop.f32.mrb[0].mxu0
    %v213 = vadd.f32 %v119, %v212
    %v214 = vpop.f32.mrb[0].mxu0
    %215 = vdwg.mxu0
    %v216 = vmax.f32 %v210, 0.0
    %v217 = vmax.f32 %v213, 0.0
    %v218 = vld [vmem:[#allocation2] sm:$0xf]
    %v219 = vld [vmem:[#allocation2 + $0x4] sm:$0xf]
    %v220 = vpack.c.bf16 %v217, %v216
    %v223 = vunpack.c.l.b16 %v218
    %v224 = vunpack.c.l.b16 %v219
    %v225 = vpack.c.b16 %v224, %v223
    %vm226 = vcmask 130048
    %v228 = vsel %vm226, %v225, 0
    %230 = vmatprep.subr.bf16.mxu0 0
    %231 = vmatpush1.bf16.msra.mxu0 %v220
    %232 = vmatprep.subr.bf16.mxu0 0
    %233 = vmatpush1.bf16.msra.mxu0 0
    %234 = vmatprep.subr.bf16.mxu0 0
    %235 = vmatpush1.bf16.msra.mxu0 0
    %236 = vmatprep.subr.bf16.mxu0 0
    %237 = vmatpush1.bf16.msra.mxu0 0
    %238 = vmatprep.subr.bf16.mxu0 0
    %239 = vmatpush1.bf16.msra.mxu0 0
    %240 = vmatprep.subr.bf16.mxu0 0
    %241 = vmatpush1.bf16.msra.mxu0 0
    %242 = vmatprep.subr.bf16.mxu0 0
    %243 = vmatpush1.bf16.msra.mxu0 0
    %244 = vmatprep.subr.bf16.mxu0 0
    %245 = vmatpush1.bf16.msra.mxu0 0
    %246 = vmatprep.subr.bf16.mxu0 0
    %247 = vmatpush1.bf16.msra.mxu0 0
    %248 = vmatprep.subr.bf16.mxu0 0
    %249 = vmatpush1.bf16.msra.mxu0 0
    %250 = vmatprep.subr.bf16.mxu0 0
    %251 = vmatpush1.bf16.msra.mxu0 0
    %252 = vmatprep.subr.bf16.mxu0 0
    %253 = vmatpush1.bf16.msra.mxu0 0
    %254 = vmatprep.subr.bf16.mxu0 0
    %255 = vmatpush1.bf16.msra.mxu0 0
    %256 = vmatprep.subr.bf16.mxu0 0
    %257 = vmatpush1.bf16.msra.mxu0 0
    %258 = vmatprep.subr.bf16.mxu0 0
    %259 = vmatpush1.bf16.msra.mxu0 0
    %260 = vmatprep.subr.bf16.mxu0 0
    %261 = vmatpush1.bf16.msra.mxu0 0
    %262 = vmatprep.mubr.bf16.mxu0 0
    %263 = vmatmul.mubr.bf16.gmra.mrb[0].mxu0 %v228
    %v264 = vpop.f32.mrb[0].mxu0
    %v265 = vadd.f32 %v216, %v264
    %v266 = vpop.f32.mrb[0].mxu0
    %v267 = vpop.f32.mrb[0].mxu0
    %v268 = vadd.f32 %v217, %v267
    %v269 = vpop.f32.mrb[0].mxu0
    %270 = vdwg.mxu0
    %v271 = vpack.c.bf16 %v268, %v265
    %v272 = vld [vmem:[#allocation8] sm:$0xf]
    %v273 = vld [vmem:[#allocation8 + $0x4] sm:$0xf]
    %v274 = vld [vmem:[#allocation8 + $0x8] sm:$0xf]
    %v275 = vld [vmem:[#allocation8 + $0xc] sm:$0xf]
    %v276 = vld [vmem:[#allocation8 + $0x10] sm:$0xf]
    %v277 = vld [vmem:[#allocation8 + $0x14] sm:$0xf]
    %v278 = vld [vmem:[#allocation8 + $0x18] sm:$0xf]
    %v279 = vld [vmem:[#allocation8 + $0x1c] sm:$0xf]
    %v280 = vld [vmem:[#allocation8 + $0x20] sm:$0xf]
    %v281 = vld [vmem:[#allocation8 + $0x24] sm:$0xf]
    %v282 = vld [vmem:[#allocation8 + $0x28] sm:$0xf]
    %v283 = vld [vmem:[#allocation8 + $0x2c] sm:$0xf]
    %v284 = vld [vmem:[#allocation8 + $0x30] sm:$0xf]
    %v285 = vld [vmem:[#allocation8 + $0x34] sm:$0xf]
    %v286 = vld [vmem:[#allocation8 + $0x38] sm:$0xf]
    %v287 = vld [vmem:[#allocation8 + $0x3c] sm:$0xf]
    %v304 = vunpack.c.l.b16 %v272
    %v305 = vunpack.c.l.b16 %v273
    %v306 = vunpack.c.l.b16 %v274
    %v307 = vunpack.c.l.b16 %v275
    %v308 = vunpack.c.l.b16 %v276
    %v309 = vunpack.c.l.b16 %v277
    %v310 = vunpack.c.l.b16 %v278
    %v311 = vunpack.c.l.b16 %v279
    %v312 = vunpack.c.l.b16 %v280
    %v313 = vunpack.c.l.b16 %v281
    %v314 = vunpack.c.l.b16 %v282
    %v315 = vunpack.c.l.b16 %v283
    %v316 = vunpack.c.l.b16 %v284
    %v317 = vunpack.c.l.b16 %v285
    %v318 = vunpack.c.l.b16 %v286
    %v319 = vunpack.c.l.b16 %v287
    %v320 = vpack.c.b16 %v305, %v304
    %v321 = vpack.c.b16 %v307, %v306
    %v322 = vpack.c.b16 %v309, %v308
    %v323 = vpack.c.b16 %v311, %v310
    %v324 = vpack.c.b16 %v313, %v312
    %v325 = vpack.c.b16 %v315, %v314
    %v326 = vpack.c.b16 %v317, %v316
    %v327 = vpack.c.b16 %v319, %v318
    %336 = vmatprep.subr.bf16.mxu0 0
    %337 = vmatpush1.bf16.msra.mxu0 %v320
    %338 = vmatprep.subr.bf16.mxu0 0
    %339 = vmatpush1.bf16.msra.mxu0 %v321
    %340 = vmatprep.subr.bf16.mxu0 0
    %341 = vmatpush1.bf16.msra.mxu0 %v322
    %342 = vmatprep.subr.bf16.mxu0 0
    %343 = vmatpush1.bf16.msra.mxu0 %v323
    %344 = vmatprep.subr.bf16.mxu0 0
    %345 = vmatpush1.bf16.msra.mxu0 %v324
    %346 = vmatprep.subr.bf16.mxu0 0
    %347 = vmatpush1.bf16.msra.mxu0 %v325
    %348 = vmatprep.subr.bf16.mxu0 0
    %349 = vmatpush1.bf16.msra.mxu0 %v326
    %350 = vmatprep.subr.bf16.mxu0 0
    %351 = vmatpush1.bf16.msra.mxu0 %v327
    %352 = vmatprep.subr.bf16.mxu0 0
    %353 = vmatpush1.bf16.msra.mxu0 0
    %354 = vmatprep.subr.bf16.mxu0 0
    %355 = vmatpush1.bf16.msra.mxu0 0
    %356 = vmatprep.subr.bf16.mxu0 0
    %357 = vmatpush1.bf16.msra.mxu0 0
    %358 = vmatprep.subr.bf16.mxu0 0
    %359 = vmatpush1.bf16.msra.mxu0 0
    %360 = vmatprep.subr.bf16.mxu0 0
    %361 = vmatpush1.bf16.msra.mxu0 0
    %362 = vmatprep.subr.bf16.mxu0 0
    %363 = vmatpush1.bf16.msra.mxu0 0
    %364 = vmatprep.subr.bf16.mxu0 0
    %365 = vmatpush1.bf16.msra.mxu0 0
    %366 = vmatprep.subr.bf16.mxu0 0
    %367 = vmatpush1.bf16.msra.mxu0 0
    %368 = vmatprep.mubr.bf16.mxu0 0
    %369 = vmatmul.mubr.bf16.gmra.mrb[0].mxu0 %v271
    %v370 = vpop.f32.mrb[0].mxu0
    %v371 = vadd.f32 0.0, %v370
    %v372 = vpop.f32.mrb[0].mxu0
    %v373 = vpop.f32.mrb[0].mxu0
    %v374 = vadd.f32 0.0, %v373
    %v375 = vpop.f32.mrb[0].mxu0
    %376 = vdwg.mxu0
    %v377 = vmax.f32 %v371, 0.0
    %v378 = vmax.f32 %v374, 0.0
    %v379 = vpack.c.bf16 %v378, %v377
    %380 = vmatprep.subr.bf16.mxu0 0
    %381 = vmatpush1.bf16.msra.mxu0 %v379
    %382 = vmatprep.subr.bf16.mxu0 0
    %383 = vmatpush1.bf16.msra.mxu0 0
    %384 = vmatprep.subr.bf16.mxu0 0
    %385 = vmatpush1.bf16.msra.mxu0 0
    %386 = vmatprep.subr.bf16.mxu0 0
    %387 = vmatpush1.bf16.msra.mxu0 0
    %388 = vmatprep.subr.bf16.mxu0 0
    %389 = vmatpush1.bf16.msra.mxu0 0
    %390 = vmatprep.subr.bf16.mxu0 0
    %391 = vmatpush1.bf16.msra.mxu0 0
    %392 = vmatprep.subr.bf16.mxu0 0
    %393 = vmatpush1.bf16.msra.mxu0 0
    %394 = vmatprep.subr.bf16.mxu0 0
    %395 = vmatpush1.bf16.msra.mxu0 0
    %396 = vmatprep.subr.bf16.mxu0 0
    %397 = vmatpush1.bf16.msra.mxu0 0
    %398 = vmatprep.subr.bf16.mxu0 0
    %399 = vmatpush1.bf16.msra.mxu0 0
    %400 = vmatprep.subr.bf16.mxu0 0
    %401 = vmatpush1.bf16.msra.mxu0 0
    %402 = vmatprep.subr.bf16.mxu0 0
    %403 = vmatpush1.bf16.msra.mxu0 0
    %404 = vmatprep.subr.bf16.mxu0 0
    %405 = vmatpush1.bf16.msra.mxu0 0
    %406 = vmatprep.subr.bf16.mxu0 0
    %407 = vmatpush1.bf16.msra.mxu0 0
    %408 = vmatprep.subr.bf16.mxu0 0
    %409 = vmatpush1.bf16.msra.mxu0 0
    %410 = vmatprep.subr.bf16.mxu0 0
    %411 = vmatpush1.bf16.msra.mxu0 0
    %412 = vmatprep.mubr.bf16.mxu0 0
    %413 = vmatmul.mubr.bf16.gmra.mrb[0].mxu0 %v228
    %v414 = vpop.f32.mrb[0].mxu0
    %v415 = vadd.f32 %v216, %v414
    %v416 = vpop.f32.mrb[0].mxu0
    %v417 = vpop.f32.mrb[0].mxu0
    %v418 = vadd.f32 %v217, %v417
    %v419 = vpop.f32.mrb[0].mxu0
    %420 = vdwg.mxu0
    %v421 = vpack.c.bf16 %v418, %v415
    %s422 = scalar_lea.vmem [#allocation8], 64
    %v423 = vld [vmem:[%s422] sm:$0xf]
    %v424 = vld [vmem:[%s422 + $0x4] sm:$0xf]
    %v425 = vld [vmem:[%s422 + $0x8] sm:$0xf]
    %v426 = vld [vmem:[%s422 + $0xc] sm:$0xf]
    %v427 = vld [vmem:[%s422 + $0x10] sm:$0xf]
    %v428 = vld [vmem:[%s422 + $0x14] sm:$0xf]
    %v429 = vld [vmem:[%s422 + $0x18] sm:$0xf]
    %v430 = vld [vmem:[%s422 + $0x1c] sm:$0xf]
    %v431 = vld [vmem:[%s422 + $0x20] sm:$0xf]
    %v432 = vld [vmem:[%s422 + $0x24] sm:$0xf]
    %v433 = vld [vmem:[%s422 + $0x28] sm:$0xf]
    %v434 = vld [vmem:[%s422 + $0x2c] sm:$0xf]
    %v435 = vld [vmem:[%s422 + $0x30] sm:$0xf]
    %v436 = vld [vmem:[%s422 + $0x34] sm:$0xf]
    %v437 = vld [vmem:[%s422 + $0x38] sm:$0xf]
    %v438 = vld [vmem:[%s422 + $0x3c] sm:$0xf]
    %v455 = vunpack.c.l.b16 %v423
    %v456 = vunpack.c.l.b16 %v424
    %v457 = vunpack.c.l.b16 %v425
    %v458 = vunpack.c.l.b16 %v426
    %v459 = vunpack.c.l.b16 %v427
    %v460 = vunpack.c.l.b16 %v428
    %v461 = vunpack.c.l.b16 %v429
    %v462 = vunpack.c.l.b16 %v430
    %v463 = vunpack.c.l.b16 %v431
    %v464 = vunpack.c.l.b16 %v432
    %v465 = vunpack.c.l.b16 %v433
    %v466 = vunpack.c.l.b16 %v434
    %v467 = vunpack.c.l.b16 %v435
    %v468 = vunpack.c.l.b16 %v436
    %v469 = vunpack.c.l.b16 %v437
    %v470 = vunpack.c.l.b16 %v438
    %v471 = vpack.c.b16 %v456, %v455
    %v472 = vpack.c.b16 %v458, %v457
    %v473 = vpack.c.b16 %v460, %v459
    %v474 = vpack.c.b16 %v462, %v461
    %v475 = vpack.c.b16 %v464, %v463
    %v476 = vpack.c.b16 %v466, %v465
    %v477 = vpack.c.b16 %v468, %v467
    %v478 = vpack.c.b16 %v470, %v469
    %487 = vmatprep.subr.bf16.mxu0 0
    %488 = vmatpush1.bf16.msra.mxu0 %v471
    %489 = vmatprep.subr.bf16.mxu0 0
    %490 = vmatpush1.bf16.msra.mxu0 %v472
    %491 = vmatprep.subr.bf16.mxu0 0
    %492 = vmatpush1.bf16.msra.mxu0 %v473
    %493 = vmatprep.subr.bf16.mxu0 0
    %494 = vmatpush1.bf16.msra.mxu0 %v474
    %495 = vmatprep.subr.bf16.mxu0 0
    %496 = vmatpush1.bf16.msra.mxu0 %v475
    %497 = vmatprep.subr.bf16.mxu0 0
    %498 = vmatpush1.bf16.msra.mxu0 %v476
    %499 = vmatprep.subr.bf16.mxu0 0
    %500 = vmatpush1.bf16.msra.mxu0 %v477
    %501 = vmatprep.subr.bf16.mxu0 0
    %502 = vmatpush1.bf16.msra.mxu0 %v478
    %503 = vmatprep.subr.bf16.mxu0 0
    %504 = vmatpush1.bf16.msra.mxu0 0
    %505 = vmatprep.subr.bf16.mxu0 0
    %506 = vmatpush1.bf16.msra.mxu0 0
    %507 = vmatprep.subr.bf16.mxu0 0
    %508 = vmatpush1.bf16.msra.mxu0 0
    %509 = vmatprep.subr.bf16.mxu0 0
    %510 = vmatpush1.bf16.msra.mxu0 0
    %511 = vmatprep.subr.bf16.mxu0 0
    %512 = vmatpush1.bf16.msra.mxu0 0
    %513 = vmatprep.subr.bf16.mxu0 0
    %514 = vmatpush1.bf16.msra.mxu0 0
    %515 = vmatprep.subr.bf16.mxu0 0
    %516 = vmatpush1.bf16.msra.mxu0 0
    %517 = vmatprep.subr.bf16.mxu0 0
    %518 = vmatpush1.bf16.msra.mxu0 0
    %519 = vmatprep.mubr.bf16.mxu0 0
    %520 = vmatmul.mubr.bf16.gmra.mrb[0].mxu0 %v421
    %v521 = vpop.f32.mrb[0].mxu0
    %v522 = vadd.f32 0.0, %v521
    %v523 = vpop.f32.mrb[0].mxu0
    %v524 = vpop.f32.mrb[0].mxu0
    %v525 = vadd.f32 0.0, %v524
    %v526 = vpop.f32.mrb[0].mxu0
    %527 = vdwg.mxu0
    %v528 = vmax.f32 %v522, 0.0
    %v529 = vmax.f32 %v525, 0.0
    %v530 = vpack.c.bf16 %v529, %v528
    %v531 = vld [vmem:[#allocation10] sm:$0xf]
    %v532 = vld [vmem:[#allocation10 + $0x4] sm:$0xf]
    %v533 = vld [vmem:[#allocation10 + $0x8] sm:$0xf]
    %v534 = vld [vmem:[#allocation10 + $0xc] sm:$0xf]
    %v535 = vld [vmem:[#allocation10 + $0x10] sm:$0xf]
    %v536 = vld [vmem:[#allocation10 + $0x14] sm:$0xf]
    %v537 = vld [vmem:[#allocation10 + $0x18] sm:$0xf]
    %v538 = vld [vmem:[#allocation10 + $0x1c] sm:$0xf]
    %v539 = vld [vmem:[#allocation10 + $0x20] sm:$0xf]
    %v540 = vld [vmem:[#allocation10 + $0x24] sm:$0xf]
    %v541 = vld [vmem:[#allocation10 + $0x28] sm:$0xf]
    %v542 = vld [vmem:[#allocation10 + $0x2c] sm:$0xf]
    %v543 = vld [vmem:[#allocation10 + $0x30] sm:$0xf]
    %v544 = vld [vmem:[#allocation10 + $0x34] sm:$0xf]
    %v545 = vld [vmem:[#allocation10 + $0x38] sm:$0xf]
    %v546 = vld [vmem:[#allocation10 + $0x3c] sm:$0xf]
    %v547 = vld [vmem:[%s6] sm:$0x1]
    %v549 = vlaneseq
    %v550 = vshrl.u32 %v549, 7
    %v551 = vsub.s32 0, %v550
    %v552 = vrot.slane %v547, %v551
    %v570 = vunpack.c.l.b16 %v531
    %v571 = vunpack.c.l.b16 %v532
    %v572 = vunpack.c.l.b16 %v533
    %v573 = vunpack.c.l.b16 %v534
    %v574 = vunpack.c.l.b16 %v535
    %v575 = vunpack.c.l.b16 %v536
    %v576 = vunpack.c.l.b16 %v537
    %v577 = vunpack.c.l.b16 %v538
    %v578 = vunpack.c.l.b16 %v539
    %v579 = vunpack.c.l.b16 %v540
    %v580 = vunpack.c.l.b16 %v541
    %v581 = vunpack.c.l.b16 %v542
    %v582 = vunpack.c.l.b16 %v543
    %v583 = vunpack.c.l.b16 %v544
    %v584 = vunpack.c.l.b16 %v545
    %v585 = vunpack.c.l.b16 %v546
    %v586 = vpack.c.b16 %v571, %v570
    %v587 = vpack.c.b16 %v573, %v572
    %v588 = vpack.c.b16 %v575, %v574
    %v589 = vpack.c.b16 %v577, %v576
    %v590 = vpack.c.b16 %v579, %v578
    %v591 = vpack.c.b16 %v581, %v580
    %v592 = vpack.c.b16 %v583, %v582
    %v593 = vpack.c.b16 %v585, %v584
    %602 = vmatprep.subr.bf16.mxu0 0
    %603 = vmatpush1.bf16.msra.mxu0 %v586
    %604 = vmatprep.subr.bf16.mxu0 0
    %605 = vmatpush1.bf16.msra.mxu0 %v587
    %606 = vmatprep.subr.bf16.mxu0 0
    %607 = vmatpush1.bf16.msra.mxu0 %v588
    %608 = vmatprep.subr.bf16.mxu0 0
    %609 = vmatpush1.bf16.msra.mxu0 %v589
    %610 = vmatprep.subr.bf16.mxu0 0
    %611 = vmatpush1.bf16.msra.mxu0 %v590
    %612 = vmatprep.subr.bf16.mxu0 0
    %613 = vmatpush1.bf16.msra.mxu0 %v591
    %614 = vmatprep.subr.bf16.mxu0 0
    %615 = vmatpush1.bf16.msra.mxu0 %v592
    %616 = vmatprep.subr.bf16.mxu0 0
    %617 = vmatpush1.bf16.msra.mxu0 %v593
    %618 = vmatprep.subr.bf16.mxu0 0
    %619 = vmatpush1.bf16.msra.mxu0 0
    %620 = vmatprep.subr.bf16.mxu0 0
    %621 = vmatpush1.bf16.msra.mxu0 0
    %622 = vmatprep.subr.bf16.mxu0 0
    %623 = vmatpush1.bf16.msra.mxu0 0
    %624 = vmatprep.subr.bf16.mxu0 0
    %625 = vmatpush1.bf16.msra.mxu0 0
    %626 = vmatprep.subr.bf16.mxu0 0
    %627 = vmatpush1.bf16.msra.mxu0 0
    %628 = vmatprep.subr.bf16.mxu0 0
    %629 = vmatpush1.bf16.msra.mxu0 0
    %630 = vmatprep.subr.bf16.mxu0 0
    %631 = vmatpush1.bf16.msra.mxu0 0
    %632 = vmatprep.subr.bf16.mxu0 0
    %633 = vmatpush1.bf16.msra.mxu0 0
    %634 = vmatprep.mubr.bf16.mxu0 0
    %635 = vmatmul.mubr.bf16.gmra.mrb[0].mxu0 %v530
    %v636 = vpop.f32.mrb[0].mxu0
    %v637 = vadd.f32 %v552, %v636
    %v638 = vpop.f32.mrb[0].mxu0
    %v639 = vpop.f32.mrb[0].mxu0
    %v640 = vadd.f32 %v552, %v639
    %v641 = vpop.f32.mrb[0].mxu0
    %642 = vdwg.mxu0
    %643 = vst [vmem:[#allocation11] sm:$0xff] %v637
    %644 = vst [vmem:[#allocation11 + $0x8] sm:$0xff] %v640
    // Predicated region
    $region50: #{tpu_custom_call.1} parent=1 // pred_check
      _
    $region51: #{tpu_custom_call.1} parent=1 // pred_check_branch
      %646 = sbr.rel (0) target = $region53
    $region52: #{tpu_custom_call.1} parent=1 // pred_region
      %s648 = ssub.s32 256, 256
      %649 = vsyncadd [#allocation4], %s648
      %s650 = sshll.u32 [#allocation11], 4
      %s651 = int_to_ptr.vmem [resolvable:$true] %s650
      %656 = dma.vmem_to_hbm [thread:$0]  %s651, 256, %s7, [#allocation4], 128, 128, 8
    $region53: #{tpu_custom_call.1} parent=1 // pred_fallthru
      _
    // Predicated region
    $region54: #{tpu_custom_call.1} parent=1 // pred_check
      _
    $region55: #{tpu_custom_call.1} parent=1 // pred_check_branch
      %658 = sbr.rel (0) target = $region57
    $region56: #{tpu_custom_call.1} parent=1 // pred_region
      %659 = dma.done [#allocation4], 256
    $region57: #{tpu_custom_call.1} parent=1 // pred_fallthru
      _
    %660 = vsyncpa [#allocation3], 1
    %661 = vsyncpa [#allocation6], 1
    %662 = vsyncpa [#allocation9], 1
    %663 = vsyncpa [#allocation4], 1

</llo_original>
